<compile_context>
chip_gen: v5e
topology: v5e:2x2
jax: 0.10.0
libtpu: 0.0.40
codegen_flags: <defaults>
</compile_context>

<pallas_src>
import functools

import jax
import jax.numpy as jnp
from jax.experimental import pallas as pl
from jax.experimental.pallas import tpu as pltpu

_NEG_INF = -1e30


# ------------------------- generation-aware config ------------------------- #

def _vmem_capacity_bytes():
    try:
        return int(pltpu.get_tpu_info().vmem_capacity_bytes)
    except Exception:
        return 0  # unknown -> conservative defaults below


_VMEM_CAP = _vmem_capacity_bytes()
if _VMEM_CAP >= 100 * 1024 * 1024:          # v5e / v6e: 128 MiB VMEM per core
    _VMEM_LIMIT_BYTES = min(int(_VMEM_CAP * 0.75), 96 * 1024 * 1024)
    _TM, _TN, _TK = 512, 512, 512
else:                                        # v7x (64 MiB / TC) or unknown
    _VMEM_LIMIT_BYTES = 48 * 1024 * 1024
    _TM, _TN, _TK = 256, 256, 512
_TQ, _TKV = 256, 256                         # attention q / kv tile targets


def _compiler_params(dim_sem):
    return pltpu.CompilerParams(dimension_semantics=dim_sem,
                                vmem_limit_bytes=_VMEM_LIMIT_BYTES)


def _tile(dim, target, mult):
    """Largest tile <= target that divides dim and is a multiple of `mult`.
    Falls back to the full dim (always a legal block shape)."""
    if dim <= target:
        return dim
    t = (target // mult) * mult
    while t >= mult:
        if dim % t == 0:
            return t
        t -= mult
    return dim


# ----------------------- multi-output projection matmul -------------------- #

def _multi_linear_kernel(*refs, n_out, activation):
    x_ref = refs[0]
    w_refs = refs[1:1 + n_out]
    b_refs = refs[1 + n_out:1 + 2 * n_out]
    o_refs = refs[1 + 2 * n_out:1 + 3 * n_out]
    acc_refs = refs[1 + 3 * n_out:]

    @pl.when(pl.program_id(2) == 0)
    def _():
        for acc in acc_refs:
            acc[...] = jnp.zeros_like(acc)

    x = x_ref[...]                                   # activation read ONCE per step
    for w_ref, acc in zip(w_refs, acc_refs):
        acc[...] += jnp.dot(x, w_ref[...], preferred_element_type=jnp.float32)

    @pl.when(pl.program_id(2) == pl.num_programs(2) - 1)
    def _():
        for b_ref, o_ref, acc in zip(b_refs, o_refs, acc_refs):
            y = acc[...] + b_ref[...].astype(jnp.float32)
            if activation == "relu":
                y = jnp.maximum(y, 0.0)
            o_ref[...] = y.astype(o_ref.dtype)


def multi_linear(x2d, weights, biases, activation=None, tm=None, tn=None, tk=None):
    """y_i = act(x @ W_i + b_i) for several same-shaped weights, tiled/pipelined.
    The activation tile is streamed from HBM once and reused for all outputs."""
    M, K = x2d.shape
    N = weights[0].shape[1]
    n_out = len(weights)
    tm = _tile(M, tm or _TM, 8)
    tn = _tile(N, tn or _TN, 128)
    tk = _tile(K, tk or _TK, 128)
    grid = (M // tm, N // tn, K // tk)

    in_specs = [pl.BlockSpec((tm, tk), lambda i, j, k: (i, k))]
    in_specs += [pl.BlockSpec((tk, tn), lambda i, j, k: (k, j))] * n_out
    in_specs += [pl.BlockSpec((1, tn), lambda i, j, k: (0, j))] * n_out
    out_specs = [pl.BlockSpec((tm, tn), lambda i, j, k: (i, j))] * n_out
    out_shape = [jax.ShapeDtypeStruct((M, N), x2d.dtype)] * n_out

    res = pl.pallas_call(
        functools.partial(_multi_linear_kernel, n_out=n_out, activation=activation),
        out_shape=out_shape,
        grid=grid,
        in_specs=in_specs,
        out_specs=out_specs,
        scratch_shapes=[pltpu.VMEM((tm, tn), jnp.float32)] * n_out,
        compiler_params=_compiler_params(("parallel", "parallel", "arbitrary")),
    )(x2d, *weights, *[b.reshape(1, N) for b in biases])
    if not isinstance(res, (list, tuple)):
        res = (res,)
    return tuple(res)


def linear(x2d, w, b, activation=None, **kw):
    return multi_linear(x2d, [w], [b], activation=activation, **kw)[0]


# -------------------- matmul + residual + LayerNorm epilogue ---------------- #

def _matmul_add_ln_kernel(x_ref, w_ref, b_ref, res_ref, g_ref, beta_ref, o_ref,
                          acc_ref, *, eps):
    @pl.when(pl.program_id(1) == 0)
    def _():
        acc_ref[...] = jnp.zeros_like(acc_ref)

    acc_ref[...] += jnp.dot(x_ref[...], w_ref[...],
                            preferred_element_type=jnp.float32)

    @pl.when(pl.program_id(1) == pl.num_programs(1) - 1)
    def _():
        z = (acc_ref[...] + b_ref[...].astype(jnp.float32)
             + res_ref[...].astype(jnp.float32))
        mean = jnp.mean(z, axis=-1, keepdims=True)
        c = z - mean
        var = jnp.mean(c * c, axis=-1, keepdims=True)
        zn = c * jax.lax.rsqrt(var + eps)
        o_ref[...] = (zn * g_ref[...].astype(jnp.float32)
                      + beta_ref[...].astype(jnp.float32)).astype(o_ref.dtype)


def linear_add_layernorm(x2d, w, b, residual2d, gamma, beta, eps=1e-5,
                         tm=None, tk=None):
    """Fused y = LayerNorm(residual + x @ w + b).  N (= d_model) stays whole
    because LayerNorm needs the full feature row; M and K are tiled."""
    M, K = x2d.shape
    _, N = w.shape
    tm = _tile(M, tm or _TM, 8)
    tk = _tile(K, tk or _TK, 128)
    grid = (M // tm, K // tk)
    return pl.pallas_call(
        functools.partial(_matmul_add_ln_kernel, eps=eps),
        out_shape=jax.ShapeDtypeStruct((M, N), x2d.dtype),
        grid=grid,
        in_specs=[pl.BlockSpec((tm, tk), lambda i, k: (i, k)),
                  pl.BlockSpec((tk, N), lambda i, k: (k, 0)),
                  pl.BlockSpec((1, N), lambda i, k: (0, 0)),
                  pl.BlockSpec((tm, N), lambda i, k: (i, 0)),
                  pl.BlockSpec((1, N), lambda i, k: (0, 0)),
                  pl.BlockSpec((1, N), lambda i, k: (0, 0))],
        out_specs=pl.BlockSpec((tm, N), lambda i, k: (i, 0)),
        scratch_shapes=[pltpu.VMEM((tm, N), jnp.float32)],
        compiler_params=_compiler_params(("parallel", "arbitrary")),
    )(x2d, w, b.reshape(1, N), residual2d, gamma.reshape(1, N),
      beta.reshape(1, N))


# ------------------------- flash-style multi-head attention ----------------- #

def _flash_attn_kernel(q_ref, k_ref, v_ref, o_ref, m_sc, l_sc, acc_sc, *,
                       n_heads, causal, scale, tq, tk):
    ki = pl.program_id(2)

    @pl.when(ki == 0)
    def _():
        m_sc[...] = jnp.full_like(m_sc, -jnp.inf)
        l_sc[...] = jnp.zeros_like(l_sc)
        acc_sc[...] = jnp.zeros_like(acc_sc)

    D = q_ref.shape[-1]
    dk = D // n_heads

    # fold 1/sqrt(dk) into q (tq*D muls instead of h*tq*tk per step)
    q = (q_ref[0] * scale).reshape(tq, n_heads, dk)
    k = k_ref[0].reshape(tk, n_heads, dk)
    v = v_ref[0].reshape(tk, n_heads, dk)

    # all heads in one batched dot_general -> [h, tq, tk] scores (f32 on MXU)
    s = jnp.einsum("qhd,khd->hqk", q, k, preferred_element_type=jnp.float32)

    if causal:
        q0 = pl.program_id(1) * tq
        k0 = ki * tk
        row = q0 + jax.lax.broadcasted_iota(jnp.int32, (tq, tk), 0)
        col = k0 + jax.lax.broadcasted_iota(jnp.int32, (tq, tk), 1)
        s = jnp.where((row >= col)[None, :, :], s, _NEG_INF)

    m_prev = m_sc[...]                                   # [h, tq, 1]
    m_new = jnp.maximum(m_prev, jnp.max(s, axis=-1, keepdims=True))
    alpha = jnp.exp(m_prev - m_new)
    p = jnp.exp(s - m_new)
    l_sc[...] = alpha * l_sc[...] + jnp.sum(p, axis=-1, keepdims=True)
    acc_sc[...] = alpha * acc_sc[...] + jnp.einsum(
        "hqk,khd->hqd", p.astype(v.dtype), v, preferred_element_type=jnp.float32)
    m_sc[...] = m_new

    @pl.when(ki == pl.num_programs(2) - 1)
    def _():
        out = acc_sc[...] * pl.reciprocal(l_sc[...], approx=True)   # [h, tq, dk]
        # merge heads on-chip -> single lane-dense [tq, D] store
        out = jnp.transpose(out, (1, 0, 2)).reshape(tq, D)
        o_ref[0] = out.astype(o_ref.dtype)


def flash_attention(q, k, v, n_heads, causal, tq=None, tk=None):
    """q: [B, Sq, D]; k/v: [B, Sk, D]. Returns merged-head [B, Sq, D]."""
    B, Sq, D = q.shape
    Sk = k.shape[1]
    dk = D // n_heads
    tq = _tile(Sq, tq or _TQ, 8)
    tk = _tile(Sk, tk or _TKV, 8)
    grid = (B, Sq // tq, Sk // tk)
    scale = float(dk) ** -0.5
    return pl.pallas_call(
        functools.partial(_flash_attn_kernel, n_heads=n_heads, causal=causal,
                          scale=scale, tq=tq, tk=tk),
        out_shape=jax.ShapeDtypeStruct((B, Sq, D), q.dtype),
        grid=grid,
        in_specs=[pl.BlockSpec((1, tq, D), lambda b, qi, ki: (b, qi, 0)),
                  pl.BlockSpec((1, tk, D), lambda b, qi, ki: (b, ki, 0)),
                  pl.BlockSpec((1, tk, D), lambda b, qi, ki: (b, ki, 0))],
        out_specs=pl.BlockSpec((1, tq, D), lambda b, qi, ki: (b, qi, 0)),
        scratch_shapes=[pltpu.VMEM((n_heads, tq, 1), jnp.float32),
                        pltpu.VMEM((n_heads, tq, 1), jnp.float32),
                        pltpu.VMEM((n_heads, tq, dk), jnp.float32)],
        compiler_params=_compiler_params(("parallel", "parallel", "arbitrary")),
    )(q, k, v)


# --------------------------- module composition ---------------------------- #

def decoder_layer(params, input_dec, mask_dec, output_enc, h,
                  compute_dtype=jnp.bfloat16):
    # mask_dec is the standard causal decoder mask; it is regenerated per-tile
    # in-kernel with broadcasted_iota, so the O(B*S^2) mask tensor never leaves HBM.
    # TODO(synk): dropout1/dropout2 and the MLP dropout are identity (eval mode);
    # an arbitrary (non-causal / padding) mask_dec would need an explicit-mask path.
    del mask_dec
    orig_dtype = input_dec.dtype
    B, Sd, D = input_dec.shape
    Se = output_enc.shape[1]

    cast = lambda a: a.astype(compute_dtype)
    x = cast(input_dec).reshape(B * Sd, D)
    enc = cast(output_enc).reshape(B * Se, D)

    # ---- masked self-attention: one-pass Q/K/V proj -> flash attn -> Wo + Add&LN
    p1 = params["mha1"]
    q1, k1, v1 = multi_linear(x, [cast(p1["wq"]), cast(p1["wk"]), cast(p1["wv"])],
                              [p1["bq"], p1["bk"], p1["bv"]])
    attn1 = flash_attention(q1.reshape(B, Sd, D), k1.reshape(B, Sd, D),
                            v1.reshape(B, Sd, D), h, causal=True)
    a1 = linear_add_layernorm(attn1.reshape(B * Sd, D), cast(p1["wo"]), p1["bo"],
                              x, params["ln1_g"], params["ln1_b"])

    # ---- cross-attention: Q proj + one-pass K/V proj -> flash attn -> Wo + Add&LN
    p2 = params["mha2"]
    q2 = linear(a1, cast(p2["wq"]), p2["bq"])
    k2, v2 = multi_linear(enc, [cast(p2["wk"]), cast(p2["wv"])],
                          [p2["bk"], p2["bv"]])
    attn2 = flash_attention(q2.reshape(B, Sd, D), k2.reshape(B, Se, D),
                            v2.reshape(B, Se, D), h, causal=False)
    a2 = linear_add_layernorm(attn2.reshape(B * Sd, D), cast(p2["wo"]), p2["bo"],
                              a1, params["ln2_g"], params["ln2_b"])

    # ---- MLP block: two K-tiled matmuls (no fully-resident weights) + Add&LN
    hid = linear(a2, cast(params["mlp_w1"]), params["mlp_b1"], activation="relu")
    a3 = linear_add_layernorm(hid, cast(params["mlp_w2"]), params["mlp_b2"], a2,
                              params["ln3_g"], params["ln3_b"])
    return a3.reshape(B, Sd, D).astype(orig_dtype)


# --------------------------- parameter creation ----------------------------- #

def _mha_params(key, d_model, wdtype):
    ks = jax.random.split(key, 4)

    def w(k):
        return (jax.random.normal(k, (d_model, d_model), jnp.float32)
                * 0.02).astype(wdtype)

    z = lambda: jnp.zeros((d_model,), jnp.float32)
    return {"wq": w(ks[0]), "bq": z(), "wk": w(ks[1]), "bk": z(),
            "wv": w(ks[2]), "bv": z(), "wo": w(ks[3]), "bo": z()}


def make_params(key, d_model, wdtype=jnp.bfloat16):
    k1, k2, k3, k4 = jax.random.split(key, 4)
    return {
        "mha1": _mha_params(k1, d_model, wdtype),
        "mha2": _mha_params(k2, d_model, wdtype),
        "ln1_g": jnp.ones((d_model,), jnp.float32),
        "ln1_b": jnp.zeros((d_model,), jnp.float32),
        "ln2_g": jnp.ones((d_model,), jnp.float32),
        "ln2_b": jnp.zeros((d_model,), jnp.float32),
        "ln3_g": jnp.ones((d_model,), jnp.float32),
        "ln3_b": jnp.zeros((d_model,), jnp.float32),
        "mlp_w1": (jax.random.normal(k3, (d_model, 2 * d_model), jnp.float32)
                   * 0.02).astype(wdtype),
        "mlp_b1": jnp.zeros((2 * d_model,), jnp.float32),
        "mlp_w2": (jax.random.normal(k4, (2 * d_model, d_model), jnp.float32)
                   * 0.02).astype(wdtype),
        "mlp_b2": jnp.zeros((d_model,), jnp.float32),
    }


# ----------------------------------- main ----------------------------------- #

if __name__ == "__main__":
    B, S_dec, S_enc, d_model, h = 2, 8, 8, 32, 4
    key = jax.random.PRNGKey(0)
    k_in, k_enc, k_par = jax.random.split(key, 3)

    input_dec = jax.random.normal(k_in, (B, S_dec, d_model), jnp.float32)
    output_enc = jax.random.normal(k_enc, (B, S_enc, d_model), jnp.float32)
    # causal decoder mask: 1 = attend, 0 = masked (regenerated in-kernel)
    mask_dec = jnp.tril(jnp.ones((S_dec, S_dec), jnp.float32))[None, None, :, :]
    mask_dec = jnp.broadcast_to(mask_dec, (B, 1, S_dec, S_dec))

    params = make_params(k_par, d_model)

    out = decoder_layer(params, input_dec, mask_dec, output_enc, h)
    out = jax.block_until_ready(out)
    assert out.shape == (B, S_dec, d_model)
    assert bool(jnp.all(jnp.isfinite(out.astype(jnp.float32))))
    print("KERNEL_OK")
</pallas_src>

<mosaic_0001>
module attributes {stable_mosaic.version = 11 : i64} {
  func.func @_multi_linear_kernel(%arg0: i32, %arg1: i32, %arg2: i32, %arg3: memref<16x32xbf16, #tpu.memory_space<vmem>>, %arg4: memref<32x32xbf16, #tpu.memory_space<vmem>>, %arg5: memref<32x32xbf16, #tpu.memory_space<vmem>>, %arg6: memref<32x32xbf16, #tpu.memory_space<vmem>>, %arg7: memref<1x32xf32, #tpu.memory_space<vmem>>, %arg8: memref<1x32xf32, #tpu.memory_space<vmem>>, %arg9: memref<1x32xf32, #tpu.memory_space<vmem>>, %arg10: memref<16x32xbf16, #tpu.memory_space<vmem>>, %arg11: memref<16x32xbf16, #tpu.memory_space<vmem>>, %arg12: memref<16x32xbf16, #tpu.memory_space<vmem>>, %arg13: memref<16x32xf32, #tpu.memory_space<vmem>>, %arg14: memref<16x32xf32, #tpu.memory_space<vmem>>, %arg15: memref<16x32xf32, #tpu.memory_space<vmem>>) attributes {dimension_semantics = [#tpu.dimension_semantics<parallel>, #tpu.dimension_semantics<parallel>, #tpu.dimension_semantics<arbitrary>], iteration_bounds = array<i64: 1, 1, 1>, scalar_prefetch = 0 : i64, scratch_operands = 3 : i64, tpu.core_type = #tpu.core_type<tc>, window_params = [{transform_indices = @transform_0, window_bounds = array<i64: 16, 32>}, {transform_indices = @transform_1, window_bounds = array<i64: 32, 32>}, {transform_indices = @transform_2, window_bounds = array<i64: 32, 32>}, {transform_indices = @transform_3, window_bounds = array<i64: 32, 32>}, {transform_indices = @transform_4, window_bounds = array<i64: 1, 32>}, {transform_indices = @transform_5, window_bounds = array<i64: 1, 32>}, {transform_indices = @transform_6, window_bounds = array<i64: 1, 32>}, {transform_indices = @transform_7, window_bounds = array<i64: 16, 32>}, {transform_indices = @transform_8, window_bounds = array<i64: 16, 32>}, {transform_indices = @transform_9, window_bounds = array<i64: 16, 32>}]} {
    %c0_i32 = arith.constant 0 : i32
    %0 = arith.cmpi eq, %arg2, %c0_i32 : i32
    %1 = arith.extui %0 : i1 to i32
    %c0_i32_0 = arith.constant 0 : i32
    %2 = arith.cmpi ne, %1, %c0_i32_0 : i32
    scf.if %2 {
      %cst_24 = arith.constant 0.000000e+00 : f32
      %22 = vector.broadcast %cst_24 : f32 to vector<16x32xf32>
      %c0_25 = arith.constant 0 : index
      %c0_26 = arith.constant 0 : index
      %23 = vector.load %arg13[%c0_25, %c0_26] : memref<16x32xf32, #tpu.memory_space<vmem>>, vector<16x32xf32>
      tpu.vector_store %arg13[%c0_25, %c0_26], %22 {strides = array<i32>} : memref<16x32xf32, #tpu.memory_space<vmem>>, vector<16x32xf32>,
      %cst_27 = arith.constant 0.000000e+00 : f32
      %24 = vector.broadcast %cst_27 : f32 to vector<16x32xf32>
      %c0_28 = arith.constant 0 : index
      %c0_29 = arith.constant 0 : index
      %25 = vector.load %arg14[%c0_28, %c0_29] : memref<16x32xf32, #tpu.memory_space<vmem>>, vector<16x32xf32>
      tpu.vector_store %arg14[%c0_28, %c0_29], %24 {strides = array<i32>} : memref<16x32xf32, #tpu.memory_space<vmem>>, vector<16x32xf32>,
      %cst_30 = arith.constant 0.000000e+00 : f32
      %26 = vector.broadcast %cst_30 : f32 to vector<16x32xf32>
      %c0_31 = arith.constant 0 : index
      %c0_32 = arith.constant 0 : index
      %27 = vector.load %arg15[%c0_31, %c0_32] : memref<16x32xf32, #tpu.memory_space<vmem>>, vector<16x32xf32>
      tpu.vector_store %arg15[%c0_31, %c0_32], %26 {strides = array<i32>} : memref<16x32xf32, #tpu.memory_space<vmem>>, vector<16x32xf32>,
    } else {
    }
    %c0 = arith.constant 0 : index
    %c0_1 = arith.constant 0 : index
    %3 = vector.load %arg3[%c0, %c0_1] : memref<16x32xbf16, #tpu.memory_space<vmem>>, vector<16x32xbf16>
    %c0_2 = arith.constant 0 : index
    %c0_3 = arith.constant 0 : index
    %4 = vector.load %arg13[%c0_2, %c0_3] : memref<16x32xf32, #tpu.memory_space<vmem>>, vector<16x32xf32>
    %c0_4 = arith.constant 0 : index
    %c0_5 = arith.constant 0 : index
    %5 = vector.load %arg4[%c0_4, %c0_5] : memref<32x32xbf16, #tpu.memory_space<vmem>>, vector<32x32xbf16>
    %cst = arith.constant dense<0.000000e+00> : vector<16x32xf32>
    %6 = tpu.matmul %3, %5, %cst {dimension_numbers = #tpu.dot_dimension_numbers<[1], [0], [0], [1], [0, 0, 1, 1], [], []>} : vector<16x32xbf16>, vector<32x32xbf16>, vector<16x32xf32> -> vector<16x32xf32>
    %7 = arith.addf %4, %6 : vector<16x32xf32>
    %c0_6 = arith.constant 0 : index
    %c0_7 = arith.constant 0 : index
    %8 = vector.load %arg13[%c0_6, %c0_7] : memref<16x32xf32, #tpu.memory_space<vmem>>, vector<16x32xf32>
    tpu.vector_store %arg13[%c0_6, %c0_7], %7 {strides = array<i32>} : memref<16x32xf32, #tpu.memory_space<vmem>>, vector<16x32xf32>,
    %c0_8 = arith.constant 0 : index
    %c0_9 = arith.constant 0 : index
    %9 = vector.load %arg14[%c0_8, %c0_9] : memref<16x32xf32, #tpu.memory_space<vmem>>, vector<16x32xf32>
    %c0_10 = arith.constant 0 : index
    %c0_11 = arith.constant 0 : index
    %10 = vector.load %arg5[%c0_10, %c0_11] : memref<32x32xbf16, #tpu.memory_space<vmem>>, vector<32x32xbf16>
    %cst_12 = arith.constant dense<0.000000e+00> : vector<16x32xf32>
    %11 = tpu.matmul %3, %10, %cst_12 {dimension_numbers = #tpu.dot_dimension_numbers<[1], [0], [0], [1], [0, 0, 1, 1], [], []>} : vector<16x32xbf16>, vector<32x32xbf16>, vector<16x32xf32> -> vector<16x32xf32>
    %12 = arith.addf %9, %11 : vector<16x32xf32>
    %c0_13 = arith.constant 0 : index
    %c0_14 = arith.constant 0 : index
    %13 = vector.load %arg14[%c0_13, %c0_14] : memref<16x32xf32, #tpu.memory_space<vmem>>, vector<16x32xf32>
    tpu.vector_store %arg14[%c0_13, %c0_14], %12 {strides = array<i32>} : memref<16x32xf32, #tpu.memory_space<vmem>>, vector<16x32xf32>,
    %c0_15 = arith.constant 0 : index
    %c0_16 = arith.constant 0 : index
    %14 = vector.load %arg15[%c0_15, %c0_16] : memref<16x32xf32, #tpu.memory_space<vmem>>, vector<16x32xf32>
    %c0_17 = arith.constant 0 : index
    %c0_18 = arith.constant 0 : index
    %15 = vector.load %arg6[%c0_17, %c0_18] : memref<32x32xbf16, #tpu.memory_space<vmem>>, vector<32x32xbf16>
    %cst_19 = arith.constant dense<0.000000e+00> : vector<16x32xf32>
    %16 = tpu.matmul %3, %15, %cst_19 {dimension_numbers = #tpu.dot_dimension_numbers<[1], [0], [0], [1], [0, 0, 1, 1], [], []>} : vector<16x32xbf16>, vector<32x32xbf16>, vector<16x32xf32> -> vector<16x32xf32>
    %17 = arith.addf %14, %16 : vector<16x32xf32>
    %c0_20 = arith.constant 0 : index
    %c0_21 = arith.constant 0 : index
    %18 = vector.load %arg15[%c0_20, %c0_21] : memref<16x32xf32, #tpu.memory_space<vmem>>, vector<16x32xf32>
    tpu.vector_store %arg15[%c0_20, %c0_21], %17 {strides = array<i32>} : memref<16x32xf32, #tpu.memory_space<vmem>>, vector<16x32xf32>,
    %c0_i32_22 = arith.constant 0 : i32
    %19 = arith.cmpi eq, %arg2, %c0_i32_22 : i32
    %20 = arith.extui %19 : i1 to i32
    %c0_i32_23 = arith.constant 0 : i32
    %21 = arith.cmpi ne, %20, %c0_i32_23 : i32
    scf.if %21 {
      %c0_24 = arith.constant 0 : index
      %c0_25 = arith.constant 0 : index
      %22 = vector.load %arg13[%c0_24, %c0_25] : memref<16x32xf32, #tpu.memory_space<vmem>>, vector<16x32xf32>
      %c0_26 = arith.constant 0 : index
      %c0_27 = arith.constant 0 : index
      %23 = vector.load %arg7[%c0_26, %c0_27] : memref<1x32xf32, #tpu.memory_space<vmem>>, vector<1x32xf32>
      %24 = vector.broadcast %23 : vector<1x32xf32> to vector<16x32xf32>
      %25 = arith.addf %22, %24 : vector<16x32xf32>
      %26 = arith.truncf %25 : vector<16x32xf32> to vector<16x32xbf16>
      %c0_28 = arith.constant 0 : index
      %c0_29 = arith.constant 0 : index
      %27 = vector.load %arg10[%c0_28, %c0_29] : memref<16x32xbf16, #tpu.memory_space<vmem>>, vector<16x32xbf16>
      tpu.vector_store %arg10[%c0_28, %c0_29], %26 {strides = array<i32>} : memref<16x32xbf16, #tpu.memory_space<vmem>>, vector<16x32xbf16>,
      %c0_30 = arith.constant 0 : index
      %c0_31 = arith.constant 0 : index
      %28 = vector.load %arg14[%c0_30, %c0_31] : memref<16x32xf32, #tpu.memory_space<vmem>>, vector<16x32xf32>
      %c0_32 = arith.constant 0 : index
      %c0_33 = arith.constant 0 : index
      %29 = vector.load %arg8[%c0_32, %c0_33] : memref<1x32xf32, #tpu.memory_space<vmem>>, vector<1x32xf32>
      %30 = vector.broadcast %29 : vector<1x32xf32> to vector<16x32xf32>
      %31 = arith.addf %28, %30 : vector<16x32xf32>
      %32 = arith.truncf %31 : vector<16x32xf32> to vector<16x32xbf16>
      %c0_34 = arith.constant 0 : index
      %c0_35 = arith.constant 0 : index
      %33 = vector.load %arg11[%c0_34, %c0_35] : memref<16x32xbf16, #tpu.memory_space<vmem>>, vector<16x32xbf16>
      tpu.vector_store %arg11[%c0_34, %c0_35], %32 {strides = array<i32>} : memref<16x32xbf16, #tpu.memory_space<vmem>>, vector<16x32xbf16>,
      %c0_36 = arith.constant 0 : index
      %c0_37 = arith.constant 0 : index
      %34 = vector.load %arg15[%c0_36, %c0_37] : memref<16x32xf32, #tpu.memory_space<vmem>>, vector<16x32xf32>
      %c0_38 = arith.constant 0 : index
      %c0_39 = arith.constant 0 : index
      %35 = vector.load %arg9[%c0_38, %c0_39] : memref<1x32xf32, #tpu.memory_space<vmem>>, vector<1x32xf32>
      %36 = vector.broadcast %35 : vector<1x32xf32> to vector<16x32xf32>
      %37 = arith.addf %34, %36 : vector<16x32xf32>
      %38 = arith.truncf %37 : vector<16x32xf32> to vector<16x32xbf16>
      %c0_40 = arith.constant 0 : index
      %c0_41 = arith.constant 0 : index
      %39 = vector.load %arg12[%c0_40, %c0_41] : memref<16x32xbf16, #tpu.memory_space<vmem>>, vector<16x32xbf16>
      tpu.vector_store %arg12[%c0_40, %c0_41], %38 {strides = array<i32>} : memref<16x32xbf16, #tpu.memory_space<vmem>>, vector<16x32xbf16>,
    } else {
    }
    return
  }
  func.func @transform_0(%arg0: i32, %arg1: i32, %arg2: i32) -> (i32, i32) {
    %c0_i32 = arith.constant 0 : i32
    return %arg0, %arg2 : i32, i32
  }
  func.func @transform_1(%arg0: i32, %arg1: i32, %arg2: i32) -> (i32, i32) {
    %c0_i32 = arith.constant 0 : i32
    return %arg2, %arg1 : i32, i32
  }
  func.func @transform_2(%arg0: i32, %arg1: i32, %arg2: i32) -> (i32, i32) {
    %c0_i32 = arith.constant 0 : i32
    return %arg2, %arg1 : i32, i32
  }
  func.func @transform_3(%arg0: i32, %arg1: i32, %arg2: i32) -> (i32, i32) {
    %c0_i32 = arith.constant 0 : i32
    return %arg2, %arg1 : i32, i32
  }
  func.func @transform_4(%arg0: i32, %arg1: i32, %arg2: i32) -> (i32, i32) {
    %c0_i32 = arith.constant 0 : i32
    %c0_i32_0 = arith.constant 0 : i32
    return %c0_i32, %arg1 : i32, i32
  }
  func.func @transform_5(%arg0: i32, %arg1: i32, %arg2: i32) -> (i32, i32) {
    %c0_i32 = arith.constant 0 : i32
    %c0_i32_0 = arith.constant 0 : i32
    return %c0_i32, %arg1 : i32, i32
  }
  func.func @transform_6(%arg0: i32, %arg1: i32, %arg2: i32) -> (i32, i32) {
    %c0_i32 = arith.constant 0 : i32
    %c0_i32_0 = arith.constant 0 : i32
    return %c0_i32, %arg1 : i32, i32
  }
  func.func @transform_7(%arg0: i32, %arg1: i32, %arg2: i32) -> (i32, i32) {
    %c0_i32 = arith.constant 0 : i32
    return %arg0, %arg1 : i32, i32
  }
  func.func @transform_8(%arg0: i32, %arg1: i32, %arg2: i32) -> (i32, i32) {
    %c0_i32 = arith.constant 0 : i32
    return %arg0, %arg1 : i32, i32
  }
  func.func @transform_9(%arg0: i32, %arg1: i32, %arg2: i32) -> (i32, i32) {
    %c0_i32 = arith.constant 0 : i32
    return %arg0, %arg1 : i32, i32
  }
}

</mosaic_0001>

<llo_original>
// kernel: tpu_custom_call.1
$region0: #{tpu_custom_call.1}
  #allocation0 [shape = 'u32[]', space=smem, size = 0x4, offset = 0x4, fixed_abs, tag = 'smem constant byte address 0x4 - core index']
  #allocation1 [shape = 'u32[72,128]{1,0:T(1,128)}', space=vmem, size = 0x9000, scoped, tag = 'internal scratch']
  #allocation2 [shape = 'f32[16,32]{1,0:T(8,128)}', space=vmem, size = 0x2000, scoped, tag = 'scratch operand']
  #allocation3 [shape = 'f32[16,32]{1,0:T(8,128)}', space=vmem, size = 0x2000, scoped, tag = 'scratch operand']
  #allocation4 [shape = 'f32[16,32]{1,0:T(8,128)}', space=vmem, size = 0x2000, scoped, tag = 'scratch operand']
  %s0 = inlined_call_operand.hbm [shape: bf16[16,32], index: 0, kind: input, shape index: {}]
  %s1 = inlined_call_operand.hbm [shape: bf16[32,32], index: 1, kind: input, shape index: {}]
  %s2 = inlined_call_operand.hbm [shape: bf16[32,32], index: 2, kind: input, shape index: {}]
  %s3 = inlined_call_operand.hbm [shape: bf16[32,32], index: 3, kind: input, shape index: {}]
  %s4 = inlined_call_operand.vmem [shape: f32[1,32], index: 4, kind: input, shape index: {}]
  %s5 = inlined_call_operand.vmem [shape: f32[1,32], index: 5, kind: input, shape index: {}]
  %s6 = inlined_call_operand.vmem [shape: f32[1,32], index: 6, kind: input, shape index: {}]
  %s7 = inlined_call_operand.hbm [shape: bf16[16,32], index: 7, kind: output, shape index: {0}]
  %s8 = inlined_call_operand.hbm [shape: bf16[16,32], index: 8, kind: output, shape index: {1}]
  %s9 = inlined_call_operand.hbm [shape: bf16[16,32], index: 9, kind: output, shape index: {2}]
  %10 = xla_tuple %s7, %s8, %s9
  %s11 = sld [smem:[#allocation0]]
  $region78: #{tpu_custom_call.1} parent=0
    _
  %s13 = ssub.s32 1, %s11
  %s14 = scalar_select 0, %s13, %s11
  $region1: #{tpu_custom_call.1} parent=0
    #allocation5 [shape = 'u8[4096]{0}', space=vmem, size = 0x1000, scoped, tag = 'input window, operand 0, single buffered']
    #allocation6 [shape = 's32[1]{0}', space=sflag, size = 0x4, scoped, tag = 'scoped memory for tpu_custom_call.1']
    #allocation7 [shape = 's32[1]{0}', space=sflag, size = 0x4, scoped, tag = 'scoped memory for tpu_custom_call.1']
    #allocation8 [shape = 'u8[8192]{0}', space=vmem, size = 0x2000, scoped, tag = 'input window, operand 1, single buffered']
    #allocation9 [shape = 's32[1]{0}', space=sflag, size = 0x4, scoped, tag = 'scoped memory for tpu_custom_call.1']
    #allocation10 [shape = 'u8[8192]{0}', space=vmem, size = 0x2000, scoped, tag = 'input window, operand 2, single buffered']
    #allocation11 [shape = 'u8[8192]{0}', space=vmem, size = 0x2000, scoped, tag = 'input window, operand 3, single buffered']
    #allocation12 [shape = 's32[1]{0}', space=sflag, size = 0x4, scoped, tag = 'scoped memory for tpu_custom_call.1']
    #allocation13 [shape = 'u8[4096]{0}', space=vmem, size = 0x1000, scoped, tag = 'output window, operand 0, single buffered']
    #allocation14 [shape = 'u8[4096]{0}', space=vmem, size = 0x1000, scoped, tag = 'output window, operand 1, single buffered']
    #allocation15 [shape = 's32[1]{0}', space=sflag, size = 0x4, scoped, tag = 'scoped memory for tpu_custom_call.1']
    #allocation16 [shape = 'u8[4096]{0}', space=vmem, size = 0x1000, scoped, tag = 'output window, operand 2, single buffered']
    %15 = vsyncpa [#allocation6], 0
    %16 = vsyncpa [#allocation9], 0
    %17 = vsyncpa [#allocation12], 0
    %18 = vsyncpa [#allocation7], 0
    %19 = vsyncpa [#allocation15], 0
    // Predicated region
    $region2: #{tpu_custom_call.1} parent=1 // pred_check
      _
    $region3: #{tpu_custom_call.1} parent=1 // pred_check_branch
      %21 = sbr.rel (0) target = $region5
    $region4: #{tpu_custom_call.1} parent=1 // pred_region
      %23 = vsyncadd [#allocation6], 0
      %s24 = sshll.u32 %s0, 4
      %s25 = int_to_ptr.hbm [resolvable:$true] %s24
      %s26 = sshll.u32 [#allocation5], 4
      %s27 = int_to_ptr.vmem [resolvable:$true] %s26
      %32 = dma.hbm_to_vmem [thread:$0]  %s25, 128, %s27, [#allocation6], 64, 64, 4
    $region5: #{tpu_custom_call.1} parent=1 // pred_fallthru
      _
    // Predicated region
    $region6: #{tpu_custom_call.1} parent=1 // pred_check
      _
    $region7: #{tpu_custom_call.1} parent=1 // pred_check_branch
      %34 = sbr.rel (0) target = $region9
    $region8: #{tpu_custom_call.1} parent=1 // pred_region
      %36 = vsyncadd [#allocation9], 0
      %s37 = sshll.u32 %s1, 4
      %s38 = int_to_ptr.hbm [resolvable:$true] %s37
      %s39 = sshll.u32 [#allocation8], 4
      %s40 = int_to_ptr.vmem [resolvable:$true] %s39
      %45 = dma.hbm_to_vmem [thread:$0]  %s38, 256, %s40, [#allocation9], 64, 64, 4
    $region9: #{tpu_custom_call.1} parent=1 // pred_fallthru
      _
    // Predicated region
    $region10: #{tpu_custom_call.1} parent=1 // pred_check
      _
    $region11: #{tpu_custom_call.1} parent=1 // pred_check_branch
      %47 = sbr.rel (0) target = $region13
    $region12: #{tpu_custom_call.1} parent=1 // pred_region
      %49 = vsyncadd [#allocation9], 0
      %s50 = sshll.u32 %s2, 4
      %s51 = int_to_ptr.hbm [resolvable:$true] %s50
      %s52 = sshll.u32 [#allocation10], 4
      %s53 = int_to_ptr.vmem [resolvable:$true] %s52
      %58 = dma.hbm_to_vmem [thread:$0]  %s51, 256, %s53, [#allocation9], 64, 64, 4
    $region13: #{tpu_custom_call.1} parent=1 // pred_fallthru
      _
    // Predicated region
    $region14: #{tpu_custom_call.1} parent=1 // pred_check
      _
    $region15: #{tpu_custom_call.1} parent=1 // pred_check_branch
      %60 = sbr.rel (0) target = $region17
    $region16: #{tpu_custom_call.1} parent=1 // pred_region
      %62 = vsyncadd [#allocation12], 0
      %s63 = sshll.u32 %s3, 4
      %s64 = int_to_ptr.hbm [resolvable:$true] %s63
      %s65 = sshll.u32 [#allocation11], 4
      %s66 = int_to_ptr.vmem [resolvable:$true] %s65
      %71 = dma.hbm_to_vmem [thread:$0]  %s64, 256, %s66, [#allocation12], 64, 64, 4
    $region17: #{tpu_custom_call.1} parent=1 // pred_fallthru
      _
    // Predicated region
    $region18: #{tpu_custom_call.1} parent=1 // pred_check
      _
    $region19: #{tpu_custom_call.1} parent=1 // pred_check_branch
      %73 = sbr.rel (0) target = $region21
    $region20: #{tpu_custom_call.1} parent=1 // pred_region
      _
    $region21: #{tpu_custom_call.1} parent=1 // pred_fallthru
      _
    // Predicated region
    $region22: #{tpu_custom_call.1} parent=1 // pred_check
      _
    $region23: #{tpu_custom_call.1} parent=1 // pred_check_branch
      %75 = sbr.rel (0) target = $region25
    $region24: #{tpu_custom_call.1} parent=1 // pred_region
      _
    $region25: #{tpu_custom_call.1} parent=1 // pred_fallthru
      _
    // Predicated region
    $region26: #{tpu_custom_call.1} parent=1 // pred_check
      _
    $region27: #{tpu_custom_call.1} parent=1 // pred_check_branch
      %77 = sbr.rel (0) target = $region29
    $region28: #{tpu_custom_call.1} parent=1 // pred_region
      _
    $region29: #{tpu_custom_call.1} parent=1 // pred_fallthru
      _
    // Predicated region
    $region30: #{tpu_custom_call.1} parent=1 // pred_check
      _
    $region31: #{tpu_custom_call.1} parent=1 // pred_check_branch
      %79 = sbr.rel (0) target = $region33
    $region32: #{tpu_custom_call.1} parent=1 // pred_region
      %81 = dma.done [#allocation6], 128
    $region33: #{tpu_custom_call.1} parent=1 // pred_fallthru
      _
    // Predicated region
    $region34: #{tpu_custom_call.1} parent=1 // pred_check
      _
    $region35: #{tpu_custom_call.1} parent=1 // pred_check_branch
      %83 = sbr.rel (0) target = $region37
    $region36: #{tpu_custom_call.1} parent=1 // pred_region
      %85 = dma.done [#allocation9], 256
    $region37: #{tpu_custom_call.1} parent=1 // pred_fallthru
      _
    // Predicated region
    $region38: #{tpu_custom_call.1} parent=1 // pred_check
      _
    $region39: #{tpu_custom_call.1} parent=1 // pred_check_branch
      %87 = sbr.rel (0) target = $region41
    $region40: #{tpu_custom_call.1} parent=1 // pred_region
      %89 = dma.done [#allocation9], 256
    $region41: #{tpu_custom_call.1} parent=1 // pred_fallthru
      _
    // Predicated region
    $region42: #{tpu_custom_call.1} parent=1 // pred_check
      _
    $region43: #{tpu_custom_call.1} parent=1 // pred_check_branch
      %91 = sbr.rel (0) target = $region45
    $region44: #{tpu_custom_call.1} parent=1 // pred_region
      %93 = dma.done [#allocation12], 256
    $region45: #{tpu_custom_call.1} parent=1 // pred_fallthru
      _
    %p95 = scmp.eq.s32.totalorder 0, 0
    // Predicated region
    $region46: #{tpu_custom_call.1} parent=1 // pred_check
      %p96 = pneg %p95
    $region47: #{tpu_custom_call.1} parent=1 // pred_check_branch
      %98 = sbr.rel (%p96) target = $region49
    $region48: #{tpu_custom_call.1} parent=1 // pred_region
      %vm99 = vcmask 261120
      %100 = vst.msk [vmem:[#allocation2] sm:$0xff] %vm99, 0.0
      %101 = vst.msk [vmem:[#allocation2 + $0x8] sm:$0xff] %vm99, 0.0
      %102 = vst.msk [vmem:[#allocation3] sm:$0xff] %vm99, 0.0
      %103 = vst.msk [vmem:[#allocation3 + $0x8] sm:$0xff] %vm99, 0.0
      %104 = vst.msk [vmem:[#allocation4] sm:$0xff] %vm99, 0.0
      %105 = vst.msk [vmem:[#allocation4 + $0x8] sm:$0xff] %vm99, 0.0
    $region49: #{tpu_custom_call.1} parent=1 // pred_fallthru
      _
    %v106 = vld [vmem:[#allocation5] sm:$0xf]
    %v107 = vld [vmem:[#allocation5 + $0x4] sm:$0xf]
    %v108 = vld [vmem:[#allocation2] sm:$0xff]
    %v109 = vld [vmem:[#allocation2 + $0x8] sm:$0xff]
    %v110 = vld [vmem:[#allocation8] sm:$0xf]
    %v111 = vld [vmem:[#allocation8 + $0x4] sm:$0xf]
    %v112 = vld [vmem:[#allocation8 + $0x8] sm:$0xf]
    %v113 = vld [vmem:[#allocation8 + $0xc] sm:$0xf]
    %v116 = vunpack.c.l.b16 %v106
    %v117 = vunpack.c.l.b16 %v107
    %v118 = vpack.c.b16 %v117, %v116
    %v123 = vunpack.c.l.b16 %v110
    %v124 = vunpack.c.l.b16 %v111
    %v125 = vunpack.c.l.b16 %v112
    %v126 = vunpack.c.l.b16 %v113
    %v127 = vpack.c.b16 %v124, %v123
    %v128 = vpack.c.b16 %v126, %v125
    %vm131 = vcmask 261120
    %v133 = vsel %vm131, %v118, 0
    %135 = vmatpush.bf16.msra.mxu0 0
    %136 = vmatpush.bf16.msra.mxu0 0
    %137 = vmatpush.bf16.msra.mxu0 0
    %138 = vmatpush.bf16.msra.mxu0 0
    %139 = vmatpush.bf16.msra.mxu0 0
    %140 = vmatpush.bf16.msra.mxu0 0
    %141 = vmatpush.bf16.msra.mxu0 %v128
    %142 = vmatpush.bf16.msra.mxu0 %v127
    %143 = vmatmul.bf16.gmra.mxu0 %v133
    %v144 = vpop.f32.mrf.mxu0
    %v145 = vadd.f32 0.0, %v144
    %v146 = vpop.f32.mrf.mxu0
    %v147 = vadd.f32 0.0, %v146
    %148 = vdwg.mxu0
    %v149 = vadd.f32 %v108, %v145
    %v150 = vadd.f32 %v109, %v147
    %151 = vst.msk [vmem:[#allocation2] sm:$0xff] %vm131, %v149
    %152 = vst.msk [vmem:[#allocation2 + $0x8] sm:$0xff] %vm131, %v150
    %v153 = vld [vmem:[#allocation3] sm:$0xff]
    %v154 = vld [vmem:[#allocation3 + $0x8] sm:$0xff]
    %v155 = vld [vmem:[#allocation10] sm:$0xf]
    %v156 = vld [vmem:[#allocation10 + $0x4] sm:$0xf]
    %v157 = vld [vmem:[#allocation10 + $0x8] sm:$0xf]
    %v158 = vld [vmem:[#allocation10 + $0xc] sm:$0xf]
    %v163 = vunpack.c.l.b16 %v155
    %v164 = vunpack.c.l.b16 %v156
    %v165 = vunpack.c.l.b16 %v157
    %v166 = vunpack.c.l.b16 %v158
    %v167 = vpack.c.b16 %v164, %v163
    %v168 = vpack.c.b16 %v166, %v165
    %171 = vmatpush.bf16.msra.mxu0 0
    %172 = vmatpush.bf16.msra.mxu0 0
    %173 = vmatpush.bf16.msra.mxu0 0
    %174 = vmatpush.bf16.msra.mxu0 0
    %175 = vmatpush.bf16.msra.mxu0 0
    %176 = vmatpush.bf16.msra.mxu0 0
    %177 = vmatpush.bf16.msra.mxu0 %v168
    %178 = vmatpush.bf16.msra.mxu0 %v167
    %179 = vmatmul.bf16.gmra.mxu0 %v133
    %v180 = vpop.f32.mrf.mxu0
    %v181 = vadd.f32 0.0, %v180
    %v182 = vpop.f32.mrf.mxu0
    %v183 = vadd.f32 0.0, %v182
    %184 = vdwg.mxu0
    %v185 = vadd.f32 %v153, %v181
    %v186 = vadd.f32 %v154, %v183
    %187 = vst.msk [vmem:[#allocation3] sm:$0xff] %vm131, %v185
    %188 = vst.msk [vmem:[#allocation3 + $0x8] sm:$0xff] %vm131, %v186
    %v189 = vld [vmem:[#allocation4] sm:$0xff]
    %v190 = vld [vmem:[#allocation4 + $0x8] sm:$0xff]
    %v191 = vld [vmem:[#allocation11] sm:$0xf]
    %v192 = vld [vmem:[#allocation11 + $0x4] sm:$0xf]
    %v193 = vld [vmem:[#allocation11 + $0x8] sm:$0xf]
    %v194 = vld [vmem:[#allocation11 + $0xc] sm:$0xf]
    %v199 = vunpack.c.l.b16 %v191
    %v200 = vunpack.c.l.b16 %v192
    %v201 = vunpack.c.l.b16 %v193
    %v202 = vunpack.c.l.b16 %v194
    %v203 = vpack.c.b16 %v200, %v199
    %v204 = vpack.c.b16 %v202, %v201
    %207 = vmatpush.bf16.msra.mxu0 0
    %208 = vmatpush.bf16.msra.mxu0 0
    %209 = vmatpush.bf16.msra.mxu0 0
    %210 = vmatpush.bf16.msra.mxu0 0
    %211 = vmatpush.bf16.msra.mxu0 0
    %212 = vmatpush.bf16.msra.mxu0 0
    %213 = vmatpush.bf16.msra.mxu0 %v204
    %214 = vmatpush.bf16.msra.mxu0 %v203
    %215 = vmatmul.bf16.gmra.mxu0 %v133
    %v216 = vpop.f32.mrf.mxu0
    %v217 = vadd.f32 0.0, %v216
    %v218 = vpop.f32.mrf.mxu0
    %v219 = vadd.f32 0.0, %v218
    %220 = vdwg.mxu0
    %v221 = vadd.f32 %v189, %v217
    %v222 = vadd.f32 %v190, %v219
    %223 = vst.msk [vmem:[#allocation4] sm:$0xff] %vm131, %v221
    %224 = vst.msk [vmem:[#allocation4 + $0x8] sm:$0xff] %vm131, %v222
    // Predicated region
    $region50: #{tpu_custom_call.1} parent=1 // pred_check
      %p225 = pneg %p95
    $region51: #{tpu_custom_call.1} parent=1 // pred_check_branch
      %227 = sbr.rel (%p225) target = $region53
    $region52: #{tpu_custom_call.1} parent=1 // pred_region
      %v228 = vld [vmem:[#allocation2] sm:$0xff]
      %v229 = vld [vmem:[#allocation2 + $0x8] sm:$0xff]
      %v230 = vld [vmem:[%s4] sm:$0x1]
      %v232 = vperm.slane %v230, 0
      %v234 = vadd.f32 %v228, %v232
      %v235 = vadd.f32 %v229, %v232
      %v236 = vpack.c.bf16 %v234, %v234
      %v237 = vpack.c.bf16 %v235, %v235
      %vm238 = vcmask 257024
      %239 = vst.msk [vmem:[#allocation13] sm:$0xf] %vm238, %v236
      %240 = vst.msk [vmem:[#allocation13 + $0x4] sm:$0xf] %vm238, %v237
      %v241 = vld [vmem:[#allocation3] sm:$0xff]
      %v242 = vld [vmem:[#allocation3 + $0x8] sm:$0xff]
      %v243 = vld [vmem:[%s5] sm:$0x1]
      %v245 = vperm.slane %v243, 0
      %v247 = vadd.f32 %v241, %v245
      %v248 = vadd.f32 %v242, %v245
      %v249 = vpack.c.bf16 %v247, %v247
      %v250 = vpack.c.bf16 %v248, %v248
      %251 = vst.msk [vmem:[#allocation14] sm:$0xf] %vm238, %v249
      %252 = vst.msk [vmem:[#allocation14 + $0x4] sm:$0xf] %vm238, %v250
      %v253 = vld [vmem:[#allocation4] sm:$0xff]
      %v254 = vld [vmem:[#allocation4 + $0x8] sm:$0xff]
      %v255 = vld [vmem:[%s6] sm:$0x1]
      %v257 = vperm.slane %v255, 0
      %v259 = vadd.f32 %v253, %v257
      %v260 = vadd.f32 %v254, %v257
      %v261 = vpack.c.bf16 %v259, %v259
      %v262 = vpack.c.bf16 %v260, %v260
      %263 = vst.msk [vmem:[#allocation16] sm:$0xf] %vm238, %v261
      %264 = vst.msk [vmem:[#allocation16 + $0x4] sm:$0xf] %vm238, %v262
    $region53: #{tpu_custom_call.1} parent=1 // pred_fallthru
      _
    // Predicated region
    $region54: #{tpu_custom_call.1} parent=1 // pred_check
      _
    $region55: #{tpu_custom_call.1} parent=1 // pred_check_branch
      %266 = sbr.rel (0) target = $region57
    $region56: #{tpu_custom_call.1} parent=1 // pred_region
      %268 = vsyncadd [#allocation7], 0
      %s269 = sshll.u32 [#allocation13], 4
      %s270 = int_to_ptr.vmem [resolvable:$true] %s269
      %s271 = sshll.u32 %s7, 4
      %s272 = int_to_ptr.hbm [resolvable:$true] %s271
      %277 = dma.vmem_to_hbm [thread:$0]  %s270, 128, %s272, [#allocation7], 64, 64, 4
    $region57: #{tpu_custom_call.1} parent=1 // pred_fallthru
      _
    // Predicated region
    $region58: #{tpu_custom_call.1} parent=1 // pred_check
      _
    $region59: #{tpu_custom_call.1} parent=1 // pred_check_branch
      %279 = sbr.rel (0) target = $region61
    $region60: #{tpu_custom_call.1} parent=1 // pred_region
      %281 = vsyncadd [#allocation15], 0
      %s282 = sshll.u32 [#allocation14], 4
      %s283 = int_to_ptr.vmem [resolvable:$true] %s282
      %s284 = sshll.u32 %s8, 4
      %s285 = int_to_ptr.hbm [resolvable:$true] %s284
      %290 = dma.vmem_to_hbm [thread:$0]  %s283, 128, %s285, [#allocation15], 64, 64, 4
    $region61: #{tpu_custom_call.1} parent=1 // pred_fallthru
      _
    // Predicated region
    $region62: #{tpu_custom_call.1} parent=1 // pred_check
      _
    $region63: #{tpu_custom_call.1} parent=1 // pred_check_branch
      %292 = sbr.rel (0) target = $region65
    $region64: #{tpu_custom_call.1} parent=1 // pred_region
      %294 = vsyncadd [#allocation15], 0
      %s295 = sshll.u32 [#allocation16], 4
      %s296 = int_to_ptr.vmem [resolvable:$true] %s295
      %s297 = sshll.u32 %s9, 4
      %s298 = int_to_ptr.hbm [resolvable:$true] %s297
      %303 = dma.vmem_to_hbm [thread:$0]  %s296, 128, %s298, [#allocation15], 64, 64, 4
    $region65: #{tpu_custom_call.1} parent=1 // pred_fallthru
      _
    // Predicated region
    $region66: #{tpu_custom_call.1} parent=1 // pred_check
      _
    $region67: #{tpu_custom_call.1} parent=1 // pred_check_branch
      %305 = sbr.rel (0) target = $region69
    $region68: #{tpu_custom_call.1} parent=1 // pred_region
      %307 = dma.done [#allocation7], 128
    $region69: #{tpu_custom_call.1} parent=1 // pred_fallthru
      _
    // Predicated region
    $region70: #{tpu_custom_call.1} parent=1 // pred_check
      _
    $region71: #{tpu_custom_call.1} parent=1 // pred_check_branch
      %309 = sbr.rel (0) target = $region73
    $region72: #{tpu_custom_call.1} parent=1 // pred_region
      %311 = dma.done [#allocation15], 128
    $region73: #{tpu_custom_call.1} parent=1 // pred_fallthru
      _
    // Predicated region
    $region74: #{tpu_custom_call.1} parent=1 // pred_check
      _
    $region75: #{tpu_custom_call.1} parent=1 // pred_check_branch
      %313 = sbr.rel (0) target = $region77
    $region76: #{tpu_custom_call.1} parent=1 // pred_region
      %315 = dma.done [#allocation15], 128
    $region77: #{tpu_custom_call.1} parent=1 // pred_fallthru
      _
    %316 = vsyncpa [#allocation6], 1
    %317 = vsyncpa [#allocation9], 1
    %318 = vsyncpa [#allocation12], 1
    %319 = vsyncpa [#allocation7], 1
    %320 = vsyncpa [#allocation15], 1

</llo_original>
